<compile_context>
chip_gen: v7x
topology: tpu7x:2x2x1
jax: 0.10.0
libtpu: 0.0.40
codegen_flags: <defaults>
</compile_context>

<pallas_src>
import functools
import math

import jax
import jax.numpy as jnp
from jax import lax
from jax.experimental import pallas as pl
from jax.experimental.pallas import tpu as pltpu

LN_EPS = 1e-5                      # nn.LayerNorm default eps
_INV_SQRT2 = 0.7071067811865475    # 1/sqrt(2) for exact (erf) GELU


def _round_up(n, m):
    return ((n + m - 1) // m) * m


def _vmem_limit_bytes():
    """Per-generation scoped-VMEM budget (~75% of capacity, capped at 100 MiB)."""
    cap = 64 * 1024 * 1024                      # conservative default (v7x-sized TC)
    try:
        info = pltpu.get_tpu_info()
        cap = int(getattr(info, "vmem_capacity_bytes", cap))
    except Exception:
        pass
    return int(min(0.75 * cap, 100 * 1024 * 1024))


def _geglu(a, g, approx):
    if approx:
        # tanh-approx GELU goes to the (otherwise idle) EUP slot; gated behind a flag since it
        # deviates slightly from torch's exact-erf default.
        return a * jax.nn.gelu(g, approximate=True)
    return a * (0.5 * g * (1.0 + lax.erf(g * _INV_SQRT2)))


def _layer_norm_f32(x_ref, gamma_ref, beta_ref):
    x = x_ref[...].astype(jnp.float32)
    mu = jnp.mean(x, axis=-1, keepdims=True)
    xc = x - mu
    var = jnp.mean(xc * xc, axis=-1, keepdims=True)
    return xc * lax.rsqrt(var + LN_EPS) * gamma_ref[...] + beta_ref[...]


# ---------------- fast path: all weights resident in VMEM, grid = (row_tiles,) ------------
def _ffn_kernel_resident(approx_gelu, x_ref, gamma_ref, beta_ref,
                         w1v_ref, b1v_ref, w1g_ref, b1g_ref,
                         w2_ref, b2_ref, o_ref):
    y = _layer_norm_f32(x_ref, gamma_ref, beta_ref).astype(w1v_ref.dtype)
    a = jnp.dot(y, w1v_ref[...], preferred_element_type=jnp.float32) + b1v_ref[...]
    g = jnp.dot(y, w1g_ref[...], preferred_element_type=jnp.float32) + b1g_ref[...]
    z = _geglu(a, g, approx_gelu).astype(w2_ref.dtype)
    o_ref[...] = (jnp.dot(z, w2_ref[...], preferred_element_type=jnp.float32)
                  + b2_ref[...]).astype(o_ref.dtype)


# ---------------- fallback: hidden dim tiled as a reduction axis, grid = (rows, hidden) ---
def _ffn_kernel_tiled(approx_gelu, x_ref, gamma_ref, beta_ref,
                      w1v_ref, b1v_ref, w1g_ref, b1g_ref,
                      w2_ref, b2_ref, o_ref, y_ref, acc_ref):
    k = pl.program_id(1)

    @pl.when(k == 0)
    def _():
        # LayerNorm once per row tile; normalized rows stay resident in VMEM (already in the
        # matmul compute dtype) for every hidden tile of this row tile.
        y_ref[...] = _layer_norm_f32(x_ref, gamma_ref, beta_ref).astype(y_ref.dtype)

    y = y_ref[...]
    a = jnp.dot(y, w1v_ref[...], preferred_element_type=jnp.float32) + b1v_ref[...]
    g = jnp.dot(y, w1g_ref[...], preferred_element_type=jnp.float32) + b1g_ref[...]
    z = _geglu(a, g, approx_gelu).astype(w2_ref.dtype)
    partial = jnp.dot(z, w2_ref[...], preferred_element_type=jnp.float32)

    @pl.when(k == 0)
    def _():
        acc_ref[...] = partial          # write first partial: no zero-fill + add

    @pl.when(k > 0)
    def _():
        acc_ref[...] += partial

    @pl.when(k == pl.num_programs(1) - 1)
    def _():
        o_ref[...] = (acc_ref[...] + b2_ref[...]).astype(o_ref.dtype)


# ---------------- one-time parameter preparation (do OUTSIDE the hot path) ----------------
def prepare_ffn_params(gamma, beta, w1, b1, w2, b2, *, compute_dtype=jnp.bfloat16):
    """GEGLU split, pad hidden to a multiple of 128, cast weights to the MXU compute dtype."""
    D, H2 = w1.shape
    H = H2 // 2
    cd = compute_dtype if compute_dtype is not None else w1.dtype

    w1v, w1g = w1[:, :H], w1[:, H:]
    b1v, b1g = b1[:, :H], b1[:, H:]
    Hp = _round_up(max(H, 128), 128)
    if Hp != H:
        # Zero-padding the value/gate columns and w2 rows is exact: gelu(0) = 0 -> z_pad = 0.
        pad = Hp - H
        w1v = jnp.pad(w1v, ((0, 0), (0, pad)))
        w1g = jnp.pad(w1g, ((0, 0), (0, pad)))
        b1v = jnp.pad(b1v, ((0, 0), (0, pad)))
        b1g = jnp.pad(b1g, ((0, 0), (0, pad)))
        w2 = jnp.pad(w2, ((0, pad), (0, 0)))

    return dict(
        gamma=gamma.astype(jnp.float32), beta=beta.astype(jnp.float32),
        w1v=w1v.astype(cd), w1g=w1g.astype(cd),
        b1v=b1v.astype(jnp.float32), b1g=b1g.astype(jnp.float32),
        w2=w2.astype(cd), b2=b2.astype(jnp.float32),
        dim=D, hidden=Hp)


# ---------------- wrapper: FeedForward.forward ------------------------------------------
def feed_forward(x, prepared, *, block_rows=512, hidden_tile=1024,
                 approx_gelu=False, force_tiled=False):
    """x: (..., dim).  `prepared` comes from prepare_ffn_params()."""
    gamma, beta = prepared["gamma"], prepared["beta"]
    w1v, b1v = prepared["w1v"], prepared["b1v"]
    w1g, b1g = prepared["w1g"], prepared["b1g"]
    w2, b2 = prepared["w2"], prepared["b2"]
    D, H = prepared["dim"], prepared["hidden"]
    cd_size = w1v.dtype.itemsize

    orig_shape = x.shape
    assert orig_shape[-1] == D, (orig_shape, D)
    N = math.prod(orig_shape[:-1]) if len(orig_shape) > 1 else 1
    x_flat = x.reshape(N, D)

    # Row tiling: keep >= 2 row tiles when possible so megacore (v7x: 2 TCs) has work to split.
    br = min(block_rows, _round_up(max((N + 1) // 2, 8), 8))
    n_pad = _round_up(N, br)
    if n_pad != N:                          # pad tail rows instead of dropping them
        x_flat = jnp.pad(x_flat, ((0, n_pad - N), (0, 0)))

    vmem_limit = _vmem_limit_bytes()
    budget = int(0.8 * vmem_limit)
    io_bytes = 2 * br * D * 2 * x.dtype.itemsize          # x + out tiles, double-buffered
    # a/g/z temporaries live in compiler-internal f32 VMEM scratch -> count them explicitly.
    res_bytes = (2 * 3 * D * H * cd_size + io_bytes
                 + br * D * cd_size + 3 * br * H * 4)
    use_resident = (not force_tiled) and res_bytes <= budget

    if use_resident:
        kernel = functools.partial(_ffn_kernel_resident, approx_gelu)
        out = pl.pallas_call(
            kernel,
            out_shape=jax.ShapeDtypeStruct((n_pad, D), x.dtype),
            grid=(n_pad // br,),
            in_specs=[
                pl.BlockSpec((br, D), lambda i: (i, 0)),    # x rows
                pl.BlockSpec((1, D), lambda i: (0, 0)),     # gamma
                pl.BlockSpec((1, D), lambda i: (0, 0)),     # beta
                pl.BlockSpec((D, H), lambda i: (0, 0)),     # w1 value half  (resident)
                pl.BlockSpec((1, H), lambda i: (0, 0)),     # b1 value half
                pl.BlockSpec((D, H), lambda i: (0, 0)),     # w1 gate half   (resident)
                pl.BlockSpec((1, H), lambda i: (0, 0)),     # b1 gate half
                pl.BlockSpec((H, D), lambda i: (0, 0)),     # w2             (resident)
                pl.BlockSpec((1, D), lambda i: (0, 0)),     # b2
            ],
            out_specs=pl.BlockSpec((br, D), lambda i: (i, 0)),
            compiler_params=pltpu.CompilerParams(
                dimension_semantics=("parallel",),
                vmem_limit_bytes=vmem_limit),
        )(x_flat, gamma, beta, w1v, b1v, w1g, b1g, w2, b2)
    else:
        def tiled_fits(t):
            return (2 * 3 * D * t * cd_size + io_bytes
                    + br * D * cd_size + br * D * 4 + 3 * br * t * 4) <= budget

        th = max((min(hidden_tile, H) // 128) * 128, 128)
        while th > 128 and not (H % th == 0 and tiled_fits(th)):
            th -= 128
        # th == 128 always divides H (prepare_ffn_params pads H to a multiple of 128).

        kernel = functools.partial(_ffn_kernel_tiled, approx_gelu)
        out = pl.pallas_call(
            kernel,
            out_shape=jax.ShapeDtypeStruct((n_pad, D), x.dtype),
            grid=(n_pad // br, H // th),
            in_specs=[
                pl.BlockSpec((br, D), lambda i, k: (i, 0)),   # x rows
                pl.BlockSpec((1, D), lambda i, k: (0, 0)),    # gamma
                pl.BlockSpec((1, D), lambda i, k: (0, 0)),    # beta
                pl.BlockSpec((D, th), lambda i, k: (0, k)),   # w1 value half (hidden tile k)
                pl.BlockSpec((1, th), lambda i, k: (0, k)),   # b1 value half
                pl.BlockSpec((D, th), lambda i, k: (0, k)),   # w1 gate half
                pl.BlockSpec((1, th), lambda i, k: (0, k)),   # b1 gate half
                pl.BlockSpec((th, D), lambda i, k: (k, 0)),   # w2 (hidden tile k)
                pl.BlockSpec((1, D), lambda i, k: (0, 0)),    # b2
            ],
            out_specs=pl.BlockSpec((br, D), lambda i, k: (i, 0)),
            scratch_shapes=[pltpu.VMEM((br, D), w1v.dtype),     # normalized rows (compute dtype)
                            pltpu.VMEM((br, D), jnp.float32)],  # f32 output accumulator
            compiler_params=pltpu.CompilerParams(
                dimension_semantics=("parallel", "arbitrary"),
                vmem_limit_bytes=vmem_limit),
        )(x_flat, gamma, beta, w1v, b1v, w1g, b1g, w2, b2)

    if n_pad != N:
        out = out[:N]
    return out.reshape(orig_shape)


# ---------------- pure-JAX reference (mirrors the PyTorch forward) ------------------------
def reference(x, params):
    gamma, beta, w1, b1, w2, b2 = params
    hi = lax.Precision.HIGHEST
    mu = x.mean(-1, keepdims=True)
    var = ((x - mu) ** 2).mean(-1, keepdims=True)
    y = (x - mu) / jnp.sqrt(var + LN_EPS) * gamma[0] + beta[0]
    h = jnp.einsum('...d,dh->...h', y, w1, precision=hi) + b1[0]
    half = h.shape[-1] // 2
    a, g = h[..., :half], h[..., half:]
    z = a * (0.5 * g * (1.0 + lax.erf(g * _INV_SQRT2)))        # a * gelu(gates)
    return jnp.einsum('...h,hd->...d', z, w2, precision=hi) + b2[0]


if __name__ == "__main__":
    # small shapes: batch=2, seq=16, dim=64, mult=4 -> hidden=256
    B, S, D, MULT = 2, 16, 64, 4
    H = D * MULT

    key = jax.random.PRNGKey(0)
    ks = jax.random.split(key, 7)
    gamma = 1.0 + 0.1 * jax.random.normal(ks[0], (1, D), jnp.float32)
    beta = 0.1 * jax.random.normal(ks[1], (1, D), jnp.float32)
    w1 = jax.random.normal(ks[2], (D, 2 * H), jnp.float32) / jnp.sqrt(D)
    b1 = 0.1 * jax.random.normal(ks[3], (1, 2 * H), jnp.float32)
    # NOTE: the PyTorch module zero-inits the last Linear; random weights here make the
    # numerical check non-trivial (forward semantics are identical either way).
    w2 = jax.random.normal(ks[4], (H, D), jnp.float32) / jnp.sqrt(H)
    b2 = 0.1 * jax.random.normal(ks[5], (1, D), jnp.float32)
    x = jax.random.normal(ks[6], (B, S, D), jnp.float32)

    ref = reference(x, (gamma, beta, w1, b1, w2, b2))

    # 1) f32 compute, weight-resident fast path (tight numerical check).
    prep_f32 = prepare_ffn_params(gamma, beta, w1, b1, w2, b2, compute_dtype=jnp.float32)
    out = jax.block_until_ready(feed_forward(x, prep_f32))
    assert out.shape == (B, S, D), out.shape
    err = float(jnp.max(jnp.abs(out - ref)))
    assert jnp.allclose(out, ref, atol=2e-3, rtol=2e-3), err

    # 2) f32 compute, tiled hidden-K accumulation path (forced, hidden_tile=128 -> 2 k-steps).
    out_t = jax.block_until_ready(
        feed_forward(x, prep_f32, hidden_tile=128, force_tiled=True))
    err_t = float(jnp.max(jnp.abs(out_t - ref)))
    assert jnp.allclose(out_t, ref, atol=2e-3, rtol=2e-3), err_t

    # 3) default production path: bf16 matmul inputs, f32 accumulation (looser tolerance).
    prep_bf16 = prepare_ffn_params(gamma, beta, w1, b1, w2, b2)
    out_bf = jax.block_until_ready(feed_forward(x, prep_bf16))
    err_bf = float(jnp.max(jnp.abs(out_bf - ref)))
    assert jnp.allclose(out_bf, ref, atol=1e-1, rtol=1e-1), err_bf

    print("KERNEL_OK")
</pallas_src>

<mosaic_0001>
module attributes {stable_mosaic.version = 11 : i64} {
  func.func @_ffn_kernel_resident(%arg0: i32, %arg1: memref<16x64xf32, #tpu.memory_space<vmem>>, %arg2: memref<1x64xf32, #tpu.memory_space<vmem>>, %arg3: memref<1x64xf32, #tpu.memory_space<vmem>>, %arg4: memref<64x256xf32, #tpu.memory_space<vmem>>, %arg5: memref<1x256xf32, #tpu.memory_space<vmem>>, %arg6: memref<64x256xf32, #tpu.memory_space<vmem>>, %arg7: memref<1x256xf32, #tpu.memory_space<vmem>>, %arg8: memref<256x64xf32, #tpu.memory_space<vmem>>, %arg9: memref<1x64xf32, #tpu.memory_space<vmem>>, %arg10: memref<16x64xf32, #tpu.memory_space<vmem>>) attributes {dimension_semantics = [#tpu.dimension_semantics<parallel>], iteration_bounds = array<i64: 2>, scalar_prefetch = 0 : i64, scratch_operands = 0 : i64, tpu.core_type = #tpu.core_type<tc>, window_params = [{transform_indices = @transform_0, window_bounds = array<i64: 16, 64>}, {pipeline_mode = #tpu.pipeline_mode<synchronous>, transform_indices = @transform_1, window_bounds = array<i64: 1, 64>}, {pipeline_mode = #tpu.pipeline_mode<synchronous>, transform_indices = @transform_2, window_bounds = array<i64: 1, 64>}, {pipeline_mode = #tpu.pipeline_mode<synchronous>, transform_indices = @transform_3, window_bounds = array<i64: 64, 256>}, {pipeline_mode = #tpu.pipeline_mode<synchronous>, transform_indices = @transform_4, window_bounds = array<i64: 1, 256>}, {pipeline_mode = #tpu.pipeline_mode<synchronous>, transform_indices = @transform_5, window_bounds = array<i64: 64, 256>}, {pipeline_mode = #tpu.pipeline_mode<synchronous>, transform_indices = @transform_6, window_bounds = array<i64: 1, 256>}, {pipeline_mode = #tpu.pipeline_mode<synchronous>, transform_indices = @transform_7, window_bounds = array<i64: 256, 64>}, {pipeline_mode = #tpu.pipeline_mode<synchronous>, transform_indices = @transform_8, window_bounds = array<i64: 1, 64>}, {transform_indices = @transform_9, window_bounds = array<i64: 16, 64>}]} {
    %c0 = arith.constant 0 : index
    %c0_0 = arith.constant 0 : index
    %0 = vector.load %arg1[%c0, %c0_0] : memref<16x64xf32, #tpu.memory_space<vmem>>, vector<16x64xf32>
    %cst = arith.constant dense<0.000000e+00> : vector<16xf32>
    %1 = vector.multi_reduction <add>, %0, %cst [1] : vector<16x64xf32> to vector<16xf32>
    %2 = vector.shape_cast %1 : vector<16xf32> to vector<16x1xf32>
    %cst_1 = arith.constant 6.400000e+01 : f32
    %3 = vector.broadcast %cst_1 : f32 to vector<16x1xf32>
    %4 = arith.divf %2, %3 : vector<16x1xf32>
    %5 = vector.broadcast %4 : vector<16x1xf32> to vector<16x64xf32>
    %6 = arith.subf %0, %5 : vector<16x64xf32>
    %7 = arith.mulf %6, %6 : vector<16x64xf32>
    %cst_2 = arith.constant dense<0.000000e+00> : vector<16xf32>
    %8 = vector.multi_reduction <add>, %7, %cst_2 [1] : vector<16x64xf32> to vector<16xf32>
    %9 = vector.shape_cast %8 : vector<16xf32> to vector<16x1xf32>
    %cst_3 = arith.constant 6.400000e+01 : f32
    %10 = vector.broadcast %cst_3 : f32 to vector<16x1xf32>
    %11 = arith.divf %9, %10 : vector<16x1xf32>
    %cst_4 = arith.constant 9.99999974E-6 : f32
    %12 = vector.broadcast %cst_4 : f32 to vector<16x1xf32>
    %13 = arith.addf %11, %12 : vector<16x1xf32>
    %14 = math.rsqrt %13 : vector<16x1xf32>
    %15 = vector.broadcast %14 : vector<16x1xf32> to vector<16x64xf32>
    %16 = arith.mulf %6, %15 : vector<16x64xf32>
    %c0_5 = arith.constant 0 : index
    %c0_6 = arith.constant 0 : index
    %17 = vector.load %arg2[%c0_5, %c0_6] : memref<1x64xf32, #tpu.memory_space<vmem>>, vector<1x64xf32>
    %18 = vector.broadcast %17 : vector<1x64xf32> to vector<16x64xf32>
    %19 = arith.mulf %16, %18 : vector<16x64xf32>
    %c0_7 = arith.constant 0 : index
    %c0_8 = arith.constant 0 : index
    %20 = vector.load %arg3[%c0_7, %c0_8] : memref<1x64xf32, #tpu.memory_space<vmem>>, vector<1x64xf32>
    %21 = vector.broadcast %20 : vector<1x64xf32> to vector<16x64xf32>
    %22 = arith.addf %19, %21 : vector<16x64xf32>
    %c0_9 = arith.constant 0 : index
    %c0_10 = arith.constant 0 : index
    %23 = vector.load %arg4[%c0_9, %c0_10] : memref<64x256xf32, #tpu.memory_space<vmem>>, vector<64x256xf32>
    %cst_11 = arith.constant dense<0.000000e+00> : vector<16x256xf32>
    %24 = tpu.matmul %22, %23, %cst_11 {dimension_numbers = #tpu.dot_dimension_numbers<[1], [0], [0], [1], [0, 0, 1, 1], [], []>} : vector<16x64xf32>, vector<64x256xf32>, vector<16x256xf32> -> vector<16x256xf32>
    %c0_12 = arith.constant 0 : index
    %c0_13 = arith.constant 0 : index
    %25 = vector.load %arg5[%c0_12, %c0_13] : memref<1x256xf32, #tpu.memory_space<vmem>>, vector<1x256xf32>
    %26 = vector.broadcast %25 : vector<1x256xf32> to vector<16x256xf32>
    %27 = arith.addf %24, %26 : vector<16x256xf32>
    %c0_14 = arith.constant 0 : index
    %c0_15 = arith.constant 0 : index
    %28 = vector.load %arg6[%c0_14, %c0_15] : memref<64x256xf32, #tpu.memory_space<vmem>>, vector<64x256xf32>
    %cst_16 = arith.constant dense<0.000000e+00> : vector<16x256xf32>
    %29 = tpu.matmul %22, %28, %cst_16 {dimension_numbers = #tpu.dot_dimension_numbers<[1], [0], [0], [1], [0, 0, 1, 1], [], []>} : vector<16x64xf32>, vector<64x256xf32>, vector<16x256xf32> -> vector<16x256xf32>
    %c0_17 = arith.constant 0 : index
    %c0_18 = arith.constant 0 : index
    %30 = vector.load %arg7[%c0_17, %c0_18] : memref<1x256xf32, #tpu.memory_space<vmem>>, vector<1x256xf32>
    %31 = vector.broadcast %30 : vector<1x256xf32> to vector<16x256xf32>
    %32 = arith.addf %29, %31 : vector<16x256xf32>
    %cst_19 = arith.constant 5.000000e-01 : f32
    %33 = vector.broadcast %cst_19 : f32 to vector<16x256xf32>
    %34 = arith.mulf %33, %32 : vector<16x256xf32>
    %cst_20 = arith.constant 0.707106769 : f32
    %35 = vector.broadcast %cst_20 : f32 to vector<16x256xf32>
    %36 = arith.mulf %32, %35 : vector<16x256xf32>
    %37 = math.erf %36 : vector<16x256xf32>
    %cst_21 = arith.constant 1.000000e+00 : f32
    %38 = vector.broadcast %cst_21 : f32 to vector<16x256xf32>
    %39 = arith.addf %38, %37 : vector<16x256xf32>
    %40 = arith.mulf %34, %39 : vector<16x256xf32>
    %41 = arith.mulf %27, %40 : vector<16x256xf32>
    %c0_22 = arith.constant 0 : index
    %c0_23 = arith.constant 0 : index
    %42 = vector.load %arg8[%c0_22, %c0_23] : memref<256x64xf32, #tpu.memory_space<vmem>>, vector<256x64xf32>
    %cst_24 = arith.constant dense<0.000000e+00> : vector<16x64xf32>
    %43 = tpu.matmul %41, %42, %cst_24 {dimension_numbers = #tpu.dot_dimension_numbers<[1], [0], [0], [1], [0, 0, 1, 1], [], []>} : vector<16x256xf32>, vector<256x64xf32>, vector<16x64xf32> -> vector<16x64xf32>
    %c0_25 = arith.constant 0 : index
    %c0_26 = arith.constant 0 : index
    %44 = vector.load %arg9[%c0_25, %c0_26] : memref<1x64xf32, #tpu.memory_space<vmem>>, vector<1x64xf32>
    %45 = vector.broadcast %44 : vector<1x64xf32> to vector<16x64xf32>
    %46 = arith.addf %43, %45 : vector<16x64xf32>
    %c0_27 = arith.constant 0 : index
    %c0_28 = arith.constant 0 : index
    %47 = vector.load %arg10[%c0_27, %c0_28] : memref<16x64xf32, #tpu.memory_space<vmem>>, vector<16x64xf32>
    tpu.vector_store %arg10[%c0_27, %c0_28], %46 {strides = array<i32>} : memref<16x64xf32, #tpu.memory_space<vmem>>, vector<16x64xf32>,
    return
  }
  func.func @transform_0(%arg0: i32) -> (i32, i32) {
    %c0_i32 = arith.constant 0 : i32
    %c0_i32_0 = arith.constant 0 : i32
    return %arg0, %c0_i32 : i32, i32
  }
  func.func @transform_1(%arg0: i32) -> (i32, i32) {
    %c0_i32 = arith.constant 0 : i32
    %c0_i32_0 = arith.constant 0 : i32
    %c0_i32_1 = arith.constant 0 : i32
    return %c0_i32, %c0_i32_0 : i32, i32
  }
  func.func @transform_2(%arg0: i32) -> (i32, i32) {
    %c0_i32 = arith.constant 0 : i32
    %c0_i32_0 = arith.constant 0 : i32
    %c0_i32_1 = arith.constant 0 : i32
    return %c0_i32, %c0_i32_0 : i32, i32
  }
  func.func @transform_3(%arg0: i32) -> (i32, i32) {
    %c0_i32 = arith.constant 0 : i32
    %c0_i32_0 = arith.constant 0 : i32
    %c0_i32_1 = arith.constant 0 : i32
    return %c0_i32, %c0_i32_0 : i32, i32
  }
  func.func @transform_4(%arg0: i32) -> (i32, i32) {
    %c0_i32 = arith.constant 0 : i32
    %c0_i32_0 = arith.constant 0 : i32
    %c0_i32_1 = arith.constant 0 : i32
    return %c0_i32, %c0_i32_0 : i32, i32
  }
  func.func @transform_5(%arg0: i32) -> (i32, i32) {
    %c0_i32 = arith.constant 0 : i32
    %c0_i32_0 = arith.constant 0 : i32
    %c0_i32_1 = arith.constant 0 : i32
    return %c0_i32, %c0_i32_0 : i32, i32
  }
  func.func @transform_6(%arg0: i32) -> (i32, i32) {
    %c0_i32 = arith.constant 0 : i32
    %c0_i32_0 = arith.constant 0 : i32
    %c0_i32_1 = arith.constant 0 : i32
    return %c0_i32, %c0_i32_0 : i32, i32
  }
  func.func @transform_7(%arg0: i32) -> (i32, i32) {
    %c0_i32 = arith.constant 0 : i32
    %c0_i32_0 = arith.constant 0 : i32
    %c0_i32_1 = arith.constant 0 : i32
    return %c0_i32, %c0_i32_0 : i32, i32
  }
  func.func @transform_8(%arg0: i32) -> (i32, i32) {
    %c0_i32 = arith.constant 0 : i32
    %c0_i32_0 = arith.constant 0 : i32
    %c0_i32_1 = arith.constant 0 : i32
    return %c0_i32, %c0_i32_0 : i32, i32
  }
  func.func @transform_9(%arg0: i32) -> (i32, i32) {
    %c0_i32 = arith.constant 0 : i32
    %c0_i32_0 = arith.constant 0 : i32
    return %arg0, %c0_i32 : i32, i32
  }
}

</mosaic_0001>

<llo_original>
// kernel: tpu_custom_call.1
$region0: #{tpu_custom_call.1}
  #allocation0 [shape = 'u32[]', space=smem, size = 0x4, offset = 0x4, fixed_abs, tag = 'smem constant byte address 0x4 - core index']
  #allocation1 [shape = 'u32[144,128]{1,0:T(1,128)}', space=vmem, size = 0x12000, scoped, tag = 'internal scratch']
  %s0 = inlined_call_operand.vmem [shape: f32[32,64], index: 0, kind: input, shape index: {}]
  %s1 = inlined_call_operand.vmem [shape: f32[1,64], index: 1, kind: input, shape index: {}]
  %s2 = inlined_call_operand.vmem [shape: f32[1,64], index: 2, kind: input, shape index: {}]
  %s3 = inlined_call_operand.vmem [shape: f32[64,256], index: 3, kind: input, shape index: {}]
  %s4 = inlined_call_operand.vmem [shape: f32[1,256], index: 4, kind: input, shape index: {}]
  %s5 = inlined_call_operand.vmem [shape: f32[64,256], index: 5, kind: input, shape index: {}]
  %s6 = inlined_call_operand.vmem [shape: f32[1,256], index: 6, kind: input, shape index: {}]
  %s7 = inlined_call_operand.vmem [shape: f32[256,64], index: 7, kind: input, shape index: {}]
  %s8 = inlined_call_operand.vmem [shape: f32[1,64], index: 8, kind: input, shape index: {}]
  %s9 = inlined_call_operand.hbm [shape: f32[32,64], index: 9, kind: output, shape index: {}]
  %s10 = sld [smem:[#allocation0]]
  $region69: #{tpu_custom_call.1} parent=0
    _
  %s12 = ssub.s32 1, %s10
  %s13 = scalar_select 0, %s12, %s10
  $region1: #{tpu_custom_call.1} parent=0
    #allocation2 [shape = 'u8[16384]{0}', space=vmem, size = 0x4000, scoped, tag = 'output window, operand 0']
    #allocation3 [shape = 's32[2]{0}', space=sflag, size = 0x8, scoped, tag = 'scoped memory for tpu_custom_call.1']
    %14 = vsyncpa [#allocation3], 0
    %s15 = scalar_lea.sflag [#allocation3], 1
    %16 = vsyncpa %s15, 0
    loop: start=0, step=1, limit=4
    $region2: #{tpu_custom_call.1} parent=1 // loop_pre_header
      _
    $region3: #{tpu_custom_call.1} parent=1 // loop_header
      %s18 = sphi 0, %s22
      %p19 = scmp.ge.s32.totalorder %s18, 4
      %s28 = sphi 0, %s30
      %s31 = sphi 0, %s28
      %s32 = sphi 0, %s31
      %s48 = sphi 0, %s32
      %s52 = sphi 0, %s52
      %s54 = sphi 0, %s52
      %s55 = sphi 0, %s54
      %s69 = sphi 0, %s55
      %s73 = sphi 0, %s73
      %s75 = sphi 0, %s73
      %s76 = sphi 0, %s75
      %s90 = sphi 0, %s76
      %s94 = sphi 0, %s94
      %s96 = sphi 0, %s94
      %s97 = sphi 0, %s96
      %s111 = sphi 0, %s97
      %s115 = sphi 0, %s115
      %s117 = sphi 0, %s115
      %s118 = sphi 0, %s117
      %s132 = sphi 0, %s118
      %s136 = sphi 0, %s136
      %s138 = sphi 0, %s136
      %s139 = sphi 0, %s138
      %s153 = sphi 0, %s139
      %s157 = sphi 0, %s157
      %s159 = sphi 0, %s157
      %s160 = sphi 0, %s159
      %s174 = sphi 0, %s160
      %s178 = sphi 0, %s178
      %s180 = sphi 0, %s178
      %s181 = sphi 0, %s180
      %s195 = sphi 0, %s181
      %s199 = sphi 0, %s199
      %s201 = sphi 0, %s199
      %s202 = sphi 0, %s201
      %s216 = sphi 0, %s202
      %s222 = sphi 0, %s224
      %s225 = sphi 0, %s222
      %s226 = sphi 0, %s225
      %s242 = sphi 0, %s226
    $region4: #{tpu_custom_call.1} parent=1 // loop_header_branch
      %21 = sbr.rel (%p19) target = $region8
    $region5: #{tpu_custom_call.1} parent=1 // loop_body
      %s23 = ssub.s32 %s18, 1
      %s24 = ssub.s32 %s18, 2
      %s25 = sadd.s32 %s18, 1
      %s26 = ssub.s32 %s18, %s25
      %p27 = scmp.eq.s32.totalorder %s26, 0
      %s29 = sadd.s32 %s28, 1
      %s30 = scalar_select %p27, %s28, %s29
      %p33 = pneg %p27
      %p34 = scmp.eq.s32.totalorder %s18, 1
      %p35 = por %p33, %p34
      %p36 = scmp.ne.s32.totalorder %s28, %s31
      %p37 = scmp.eq.s32.totalorder %s18, 0
      %p38 = por %p36, %p37
      %p39 = scmp.ne.s32.totalorder %s28, %s31
      %p40 = scmp.eq.s32.totalorder %s23, 1
      %p41 = por %p39, %p40
      %p42 = scmp.ne.s32.totalorder %s31, %s32
      %p43 = scmp.eq.s32.totalorder %s23, 0
      %p44 = por %p42, %p43
      %p45 = scmp.ne.s32.totalorder %s31, %s32
      %p46 = scmp.eq.s32.totalorder %s24, 1
      %p47 = por %p45, %p46
      %p49 = scmp.ne.s32.totalorder %s32, %s48
      %p50 = scmp.eq.s32.totalorder %s24, 0
      %p51 = por %p49, %p50
      %s53 = sadd.s32 %s52, 1
      %p56 = scmp.eq.s32.totalorder %s18, 1
      %p57 = scmp.ne.s32.totalorder %s52, %s54
      %p58 = scmp.eq.s32.totalorder %s18, 0
      %p59 = por %p57, %p58
      %p60 = scmp.ne.s32.totalorder %s52, %s54
      %p61 = scmp.eq.s32.totalorder %s23, 1
      %p62 = por %p60, %p61
      %p63 = scmp.ne.s32.totalorder %s54, %s55
      %p64 = scmp.eq.s32.totalorder %s23, 0
      %p65 = por %p63, %p64
      %p66 = scmp.ne.s32.totalorder %s54, %s55
      %p67 = scmp.eq.s32.totalorder %s24, 1
      %p68 = por %p66, %p67
      %p70 = scmp.ne.s32.totalorder %s55, %s69
      %p71 = scmp.eq.s32.totalorder %s24, 0
      %p72 = por %p70, %p71
      %s74 = sadd.s32 %s73, 1
      %p77 = scmp.eq.s32.totalorder %s18, 1
      %p78 = scmp.ne.s32.totalorder %s73, %s75
      %p79 = scmp.eq.s32.totalorder %s18, 0
      %p80 = por %p78, %p79
      %p81 = scmp.ne.s32.totalorder %s73, %s75
      %p82 = scmp.eq.s32.totalorder %s23, 1
      %p83 = por %p81, %p82
      %p84 = scmp.ne.s32.totalorder %s75, %s76
      %p85 = scmp.eq.s32.totalorder %s23, 0
      %p86 = por %p84, %p85
      %p87 = scmp.ne.s32.totalorder %s75, %s76
      %p88 = scmp.eq.s32.totalorder %s24, 1
      %p89 = por %p87, %p88
      %p91 = scmp.ne.s32.totalorder %s76, %s90
      %p92 = scmp.eq.s32.totalorder %s24, 0
      %p93 = por %p91, %p92
      %s95 = sadd.s32 %s94, 1
      %p98 = scmp.eq.s32.totalorder %s18, 1
      %p99 = scmp.ne.s32.totalorder %s94, %s96
      %p100 = scmp.eq.s32.totalorder %s18, 0
      %p101 = por %p99, %p100
      %p102 = scmp.ne.s32.totalorder %s94, %s96
      %p103 = scmp.eq.s32.totalorder %s23, 1
      %p104 = por %p102, %p103
      %p105 = scmp.ne.s32.totalorder %s96, %s97
      %p106 = scmp.eq.s32.totalorder %s23, 0
      %p107 = por %p105, %p106
      %p108 = scmp.ne.s32.totalorder %s96, %s97
      %p109 = scmp.eq.s32.totalorder %s24, 1
      %p110 = por %p108, %p109
      %p112 = scmp.ne.s32.totalorder %s97, %s111
      %p113 = scmp.eq.s32.totalorder %s24, 0
      %p114 = por %p112, %p113
      %s116 = sadd.s32 %s115, 1
      %p119 = scmp.eq.s32.totalorder %s18, 1
      %p120 = scmp.ne.s32.totalorder %s115, %s117
      %p121 = scmp.eq.s32.totalorder %s18, 0
      %p122 = por %p120, %p121
      %p123 = scmp.ne.s32.totalorder %s115, %s117
      %p124 = scmp.eq.s32.totalorder %s23, 1
      %p125 = por %p123, %p124
      %p126 = scmp.ne.s32.totalorder %s117, %s118
      %p127 = scmp.eq.s32.totalorder %s23, 0
      %p128 = por %p126, %p127
      %p129 = scmp.ne.s32.totalorder %s117, %s118
      %p130 = scmp.eq.s32.totalorder %s24, 1
      %p131 = por %p129, %p130
      %p133 = scmp.ne.s32.totalorder %s118, %s132
      %p134 = scmp.eq.s32.totalorder %s24, 0
      %p135 = por %p133, %p134
      %s137 = sadd.s32 %s136, 1
      %p140 = scmp.eq.s32.totalorder %s18, 1
      %p141 = scmp.ne.s32.totalorder %s136, %s138
      %p142 = scmp.eq.s32.totalorder %s18, 0
      %p143 = por %p141, %p142
      %p144 = scmp.ne.s32.totalorder %s136, %s138
      %p145 = scmp.eq.s32.totalorder %s23, 1
      %p146 = por %p144, %p145
      %p147 = scmp.ne.s32.totalorder %s138, %s139
      %p148 = scmp.eq.s32.totalorder %s23, 0
      %p149 = por %p147, %p148
      %p150 = scmp.ne.s32.totalorder %s138, %s139
      %p151 = scmp.eq.s32.totalorder %s24, 1
      %p152 = por %p150, %p151
      %p154 = scmp.ne.s32.totalorder %s139, %s153
      %p155 = scmp.eq.s32.totalorder %s24, 0
      %p156 = por %p154, %p155
      %s158 = sadd.s32 %s157, 1
      %p161 = scmp.eq.s32.totalorder %s18, 1
      %p162 = scmp.ne.s32.totalorder %s157, %s159
      %p163 = scmp.eq.s32.totalorder %s18, 0
      %p164 = por %p162, %p163
      %p165 = scmp.ne.s32.totalorder %s157, %s159
      %p166 = scmp.eq.s32.totalorder %s23, 1
      %p167 = por %p165, %p166
      %p168 = scmp.ne.s32.totalorder %s159, %s160
      %p169 = scmp.eq.s32.totalorder %s23, 0
      %p170 = por %p168, %p169
      %p171 = scmp.ne.s32.totalorder %s159, %s160
      %p172 = scmp.eq.s32.totalorder %s24, 1
      %p173 = por %p171, %p172
      %p175 = scmp.ne.s32.totalorder %s160, %s174
      %p176 = scmp.eq.s32.totalorder %s24, 0
      %p177 = por %p175, %p176
      %s179 = sadd.s32 %s178, 1
      %p182 = scmp.eq.s32.totalorder %s18, 1
      %p183 = scmp.ne.s32.totalorder %s178, %s180
      %p184 = scmp.eq.s32.totalorder %s18, 0
      %p185 = por %p183, %p184
      %p186 = scmp.ne.s32.totalorder %s178, %s180
      %p187 = scmp.eq.s32.totalorder %s23, 1
      %p188 = por %p186, %p187
      %p189 = scmp.ne.s32.totalorder %s180, %s181
      %p190 = scmp.eq.s32.totalorder %s23, 0
      %p191 = por %p189, %p190
      %p192 = scmp.ne.s32.totalorder %s180, %s181
      %p193 = scmp.eq.s32.totalorder %s24, 1
      %p194 = por %p192, %p193
      %p196 = scmp.ne.s32.totalorder %s181, %s195
      %p197 = scmp.eq.s32.totalorder %s24, 0
      %p198 = por %p196, %p197
      %s200 = sadd.s32 %s199, 1
      %p203 = scmp.eq.s32.totalorder %s18, 1
      %p204 = scmp.ne.s32.totalorder %s199, %s201
      %p205 = scmp.eq.s32.totalorder %s18, 0
      %p206 = por %p204, %p205
      %p207 = scmp.ne.s32.totalorder %s199, %s201
      %p208 = scmp.eq.s32.totalorder %s23, 1
      %p209 = por %p207, %p208
      %p210 = scmp.ne.s32.totalorder %s201, %s202
      %p211 = scmp.eq.s32.totalorder %s23, 0
      %p212 = por %p210, %p211
      %p213 = scmp.ne.s32.totalorder %s201, %s202
      %p214 = scmp.eq.s32.totalorder %s24, 1
      %p215 = por %p213, %p214
      %p217 = scmp.ne.s32.totalorder %s202, %s216
      %p218 = scmp.eq.s32.totalorder %s24, 0
      %p219 = por %p217, %p218
      %s220 = ssub.s32 %s18, %s25
      %p221 = scmp.eq.s32.totalorder %s220, 0
      %s223 = sadd.s32 %s222, 1
      %s224 = scalar_select %p221, %s222, %s223
      %p227 = pneg %p221
      %p228 = scmp.eq.s32.totalorder %s18, 1
      %p229 = por %p227, %p228
      %p230 = scmp.ne.s32.totalorder %s222, %s225
      %p231 = scmp.eq.s32.totalorder %s18, 0
      %p232 = por %p230, %p231
      %p233 = scmp.ne.s32.totalorder %s222, %s225
      %p234 = scmp.eq.s32.totalorder %s23, 1
      %p235 = por %p233, %p234
      %p236 = scmp.ne.s32.totalorder %s225, %s226
      %p237 = scmp.eq.s32.totalorder %s23, 0
      %p238 = por %p236, %p237
      %p239 = scmp.ne.s32.totalorder %s225, %s226
      %p240 = scmp.eq.s32.totalorder %s24, 1
      %p241 = por %p239, %p240
      %p243 = scmp.ne.s32.totalorder %s226, %s242
      %p244 = scmp.eq.s32.totalorder %s24, 0
      %p245 = por %p243, %p244
      %p246 = scmp.le.s32.totalorder 1, %s18
      %p247 = scmp.lt.s32.totalorder %s18, 3
      %p248 = pnand %p246, %p247
      %p249 = pneg %p248
      // Predicated region
      $region9: #{tpu_custom_call.1} parent=5 // pred_check
        _
      $region10: #{tpu_custom_call.1} parent=5 // pred_check_branch
        %251 = sbr.rel (%p248) target = $region12
      $region11: #{tpu_custom_call.1} parent=5 // pred_region
        %s252 = ssub.s32 %s18, 1
        // Predicated region
        $region13: #{tpu_custom_call.1} parent=11 // pred_check
          %p253 = pneg %p65
        $region14: #{tpu_custom_call.1} parent=11 // pred_check_branch
          %255 = sbr.rel (%p253) target = $region16
        $region15: #{tpu_custom_call.1} parent=11 // pred_region
          _
        $region16: #{tpu_custom_call.1} parent=11 // pred_fallthru
          _
        // Predicated region
        $region17: #{tpu_custom_call.1} parent=11 // pred_check
          %p256 = pneg %p86
        $region18: #{tpu_custom_call.1} parent=11 // pred_check_branch
          %258 = sbr.rel (%p256) target = $region20
        $region19: #{tpu_custom_call.1} parent=11 // pred_region
          _
        $region20: #{tpu_custom_call.1} parent=11 // pred_fallthru
          _
        // Predicated region
        $region21: #{tpu_custom_call.1} parent=11 // pred_check
          %p259 = pneg %p107
        $region22: #{tpu_custom_call.1} parent=11 // pred_check_branch
          %261 = sbr.rel (%p259) target = $region24
        $region23: #{tpu_custom_call.1} parent=11 // pred_region
          _
        $region24: #{tpu_custom_call.1} parent=11 // pred_fallthru
          _
        // Predicated region
        $region25: #{tpu_custom_call.1} parent=11 // pred_check
          %p262 = pneg %p128
        $region26: #{tpu_custom_call.1} parent=11 // pred_check_branch
          %264 = sbr.rel (%p262) target = $region28
        $region27: #{tpu_custom_call.1} parent=11 // pred_region
          _
        $region28: #{tpu_custom_call.1} parent=11 // pred_fallthru
          _
        // Predicated region
        $region29: #{tpu_custom_call.1} parent=11 // pred_check
          %p265 = pneg %p149
        $region30: #{tpu_custom_call.1} parent=11 // pred_check_branch
          %267 = sbr.rel (%p265) target = $region32
        $region31: #{tpu_custom_call.1} parent=11 // pred_region
          _
        $region32: #{tpu_custom_call.1} parent=11 // pred_fallthru
          _
        // Predicated region
        $region33: #{tpu_custom_call.1} parent=11 // pred_check
          %p268 = pneg %p170
        $region34: #{tpu_custom_call.1} parent=11 // pred_check_branch
          %270 = sbr.rel (%p268) target = $region36
        $region35: #{tpu_custom_call.1} parent=11 // pred_region
          _
        $region36: #{tpu_custom_call.1} parent=11 // pred_fallthru
          _
        // Predicated region
        $region37: #{tpu_custom_call.1} parent=11 // pred_check
          %p271 = pneg %p191
        $region38: #{tpu_custom_call.1} parent=11 // pred_check_branch
          %273 = sbr.rel (%p271) target = $region40
        $region39: #{tpu_custom_call.1} parent=11 // pred_region
          _
        $region40: #{tpu_custom_call.1} parent=11 // pred_fallthru
          _
        // Predicated region
        $region41: #{tpu_custom_call.1} parent=11 // pred_check
          %p274 = pneg %p212
        $region42: #{tpu_custom_call.1} parent=11 // pred_check_branch
          %276 = sbr.rel (%p274) target = $region44
        $region43: #{tpu_custom_call.1} parent=11 // pred_region
          _
        $region44: #{tpu_custom_call.1} parent=11 // pred_fallthru
          _
      $region12: #{tpu_custom_call.1} parent=5 // pred_fallthru
        _
      %p277 = scmp.lt.s32.totalorder %s18, 2
      // Predicated region
      $region45: #{tpu_custom_call.1} parent=5 // pred_check
        %p278 = pneg %p277
      $region46: #{tpu_custom_call.1} parent=5 // pred_check_branch
        %280 = sbr.rel (%p278) target = $region48
      $region47: #{tpu_custom_call.1} parent=5 // pred_region
        // Predicated region
        $region49: #{tpu_custom_call.1} parent=47 // pred_check
          %p281 = pneg %p38
        $region50: #{tpu_custom_call.1} parent=47 // pred_check_branch
          %283 = sbr.rel (%p281) target = $region52
        $region51: #{tpu_custom_call.1} parent=47 // pred_region
          %s284 = smul.u32 2, %s18
          %p285 = scmp.lt.s32.totalorder %s284, 3
          %s286 = scalar_select %p285, %s284, 3
          %s287 = smul.addr %s286, 8
          %s288 = scalar_lea.vmem %s0, %s287
          %s289 = smul.u32 2, %s18
        $region52: #{tpu_custom_call.1} parent=47 // pred_fallthru
          _
      $region48: #{tpu_custom_call.1} parent=5 // pred_fallthru
        _
      %p290 = scmp.le.s32.totalorder 1, %s18
      %p291 = scmp.lt.s32.totalorder %s18, 3
      %p292 = pnand %p290, %p291
      %p293 = pneg %p292
      // Predicated region
      $region53: #{tpu_custom_call.1} parent=5 // pred_check
        _
      $region54: #{tpu_custom_call.1} parent=5 // pred_check_branch
        %295 = sbr.rel (%p292) target = $region56
      $region55: #{tpu_custom_call.1} parent=5 // pred_region
        %s296 = ssub.s32 %s18, 1
        %s297 = smul.u32 2, %s23
        %p298 = scmp.lt.s32.totalorder %s297, 3
        %s299 = scalar_select %p298, %s297, 3
        %s300 = smul.addr %s299, 8
        %s301 = scalar_lea.vmem %s0, %s300
        %p302 = pneg %p44
        %p303 = pneg %p41
        %p304 = pneg %p65
        %p305 = pneg %p62
        %p306 = pneg %p86
        %p307 = pneg %p83
        %p308 = pneg %p107
        %p309 = pneg %p104
        %p310 = pneg %p128
        %p311 = pneg %p125
        %p312 = pneg %p149
        %p313 = pneg %p146
        %p314 = pneg %p170
        %p315 = pneg %p167
        %p316 = pneg %p191
        %p317 = pneg %p188
        %p318 = pneg %p212
        %p319 = pneg %p209
        %p320 = pneg %p238
        %p321 = pneg %p235
        %s322 = sand.u32 %s225, 1
        %s323 = scalar_lea.sflag [#allocation3], %s322
        %s324 = sand.u32 %s225, 1
        %s325 = smul.addr %s324, 16
        %s326 = scalar_lea.vmem [#allocation2], %s325
        %s327 = smul.u32 2, %s23
        %p328 = scmp.lt.s32.totalorder %s327, 3
        %s329 = scalar_select %p328, %s327, 3
        %s330 = smul.addr %s329, 8
        %s331 = scalar_lea.vmem %s0, %s330
        %s332 = smul.u32 2, %s23
        %s333 = smul.u32 2, %s23
        %v334 = vld [vmem:[%s331] sm:$0xff]
        %v335 = vld [vmem:[%s331 + $0x8] sm:$0xff]
        %vm336 = vcmask 523264
        %v337 = vsel %vm336, %v334, 0.0
        %338 = vadd.xlane.f32.xlu0 %v337
        %v339 = vpop.xlane.xlu0 %338
        %v340 = vsel %vm336, %v335, 0.0
        %341 = vadd.xlane.f32.xlu0 %v340
        %v342 = vpop.xlane.xlu0 %341
        %v343 = vrcp.pop 64.0
        %v344 = vmul.f32 %v339, %v343
        %v345 = vmul.f32 %v342, %v343
        %v346 = vsub.f32 %v334, %v344
        %v347 = vsub.f32 %v335, %v345
        %v348 = vmul.f32 %v346, %v346
        %v349 = vmul.f32 %v347, %v347
        %v350 = vsel %vm336, %v348, 0.0
        %351 = vadd.xlane.f32.xlu0 %v350
        %v352 = vpop.xlane.xlu0 %351
        %v353 = vsel %vm336, %v349, 0.0
        %354 = vadd.xlane.f32.xlu0 %v353
        %v355 = vpop.xlane.xlu0 %354
        %v356 = vmul.f32 %v352, %v343
        %v357 = vmul.f32 %v355, %v343
        %v358 = vadd.f32 %v356, 1e-05
        %v359 = vadd.f32 %v357, 1e-05
        %v360 = vrsqrt.pop %v358
        %v361 = vrsqrt.pop %v359
        %v362 = vmul.f32 %v346, %v360
        %v363 = vmul.f32 %v347, %v361
        %v364 = vld [vmem:[%s1] sm:$0x1]
        %v366 = vlaneseq
        %v367 = vshrl.u32 %v366, 7
        %v368 = vsub.s32 0, %v367
        %v369 = vrot.slane %v364, %v368
        %v371 = vmul.f32 %v362, %v369
        %v372 = vmul.f32 %v363, %v369
        %v373 = vld [vmem:[%s2] sm:$0x1]
        %v375 = vlaneseq
        %v376 = vshrl.u32 %v375, 7
        %v377 = vsub.s32 0, %v376
        %v378 = vrot.slane %v373, %v377
        %v380 = vadd.f32 %v371, %v378
        %v381 = vadd.f32 %v372, %v378
        %v382 = vld [vmem:[%s3] sm:$0xff]
        %v383 = vld [vmem:[%s3 + $0x8] sm:$0xff]
        %v384 = vld [vmem:[%s3 + $0x10] sm:$0xff]
        %v385 = vld [vmem:[%s3 + $0x18] sm:$0xff]
        %v386 = vld [vmem:[%s3 + $0x20] sm:$0xff]
        %v387 = vld [vmem:[%s3 + $0x28] sm:$0xff]
        %v388 = vld [vmem:[%s3 + $0x30] sm:$0xff]
        %v389 = vld [vmem:[%s3 + $0x38] sm:$0xff]
        %v390 = vld [vmem:[%s3 + $0x40] sm:$0xff]
        %v391 = vld [vmem:[%s3 + $0x48] sm:$0xff]
        %v392 = vld [vmem:[%s3 + $0x50] sm:$0xff]
        %v393 = vld [vmem:[%s3 + $0x58] sm:$0xff]
        %v394 = vld [vmem:[%s3 + $0x60] sm:$0xff]
        %v395 = vld [vmem:[%s3 + $0x68] sm:$0xff]
        %v396 = vld [vmem:[%s3 + $0x70] sm:$0xff]
        %v397 = vld [vmem:[%s3 + $0x78] sm:$0xff]
        %v398 = vld [vmem:[%s4] sm:$0x3]
        %v400 = vlaneseq
        %v401 = vshrl.u32 %v400, 7
        %v402 = vsub.s32 0, %v401
        %v403 = vrot.slane %v398, %v402
        %v404 = vlaneseq
        %v405 = vshrl.u32 %v404, 7
        %v406 = vsub.s32 1, %v405
        %v407 = vrot.slane %v398, %v406
        %v411 = vsel %vm336, %v380, 0
        %v414 = vsel %vm336, %v381, 0
        %416 = vmatprep.subr.mxu0 %v383
        %417 = vmatpush1.msra.mxu0 %v382
        %418 = vmatprep.subr.mxu0 %v385
        %419 = vmatpush1.msra.mxu0 %v384
        %420 = vmatprep.subr.mxu0 %v387
        %421 = vmatpush1.msra.mxu0 %v386
        %422 = vmatprep.subr.mxu0 %v389
        %423 = vmatpush1.msra.mxu0 %v388
        %424 = vmatprep.subr.mxu0 %v391
        %425 = vmatpush1.msra.mxu0 %v390
        %426 = vmatprep.subr.mxu0 %v393
        %427 = vmatpush1.msra.mxu0 %v392
        %428 = vmatprep.subr.mxu0 %v395
        %429 = vmatpush1.msra.mxu0 %v394
        %430 = vmatprep.subr.mxu0 %v397
        %431 = vmatpush1.msra.mxu0 %v396
        %432 = vmatprep.subr.mxu0 0.0
        %433 = vmatpush1.msra.mxu0 0.0
        %434 = vmatprep.subr.mxu0 0.0
        %435 = vmatpush1.msra.mxu0 0.0
        %436 = vmatprep.subr.mxu0 0.0
        %437 = vmatpush1.msra.mxu0 0.0
        %438 = vmatprep.subr.mxu0 0.0
        %439 = vmatpush1.msra.mxu0 0.0
        %440 = vmatprep.subr.mxu0 0.0
        %441 = vmatpush1.msra.mxu0 0.0
        %442 = vmatprep.subr.mxu0 0.0
        %443 = vmatpush1.msra.mxu0 0.0
        %444 = vmatprep.subr.mxu0 0.0
        %445 = vmatpush1.msra.mxu0 0.0
        %446 = vmatprep.subr.mxu0 0.0
        %447 = vmatpush1.msra.mxu0 0.0
        %448 = vmatprep.subr.mxu0 0.0
        %449 = vmatpush1.msra.mxu0 0.0
        %450 = vmatprep.subr.mxu0 0.0
        %451 = vmatpush1.msra.mxu0 0.0
        %452 = vmatprep.subr.mxu0 0.0
        %453 = vmatpush1.msra.mxu0 0.0
        %454 = vmatprep.subr.mxu0 0.0
        %455 = vmatpush1.msra.mxu0 0.0
        %456 = vmatprep.subr.mxu0 0.0
        %457 = vmatpush1.msra.mxu0 0.0
        %458 = vmatprep.subr.mxu0 0.0
        %459 = vmatpush1.msra.mxu0 0.0
        %460 = vmatprep.subr.mxu0 0.0
        %461 = vmatpush1.msra.mxu0 0.0
        %462 = vmatprep.subr.mxu0 0.0
        %463 = vmatpush1.msra.mxu0 0.0
        %464 = vmatprep.subr.mxu0 0.0
        %465 = vmatpush1.msra.mxu0 0.0
        %466 = vmatprep.subr.mxu0 0.0
        %467 = vmatpush1.msra.mxu0 0.0
        %468 = vmatprep.subr.mxu0 0.0
        %469 = vmatpush1.msra.mxu0 0.0
        %470 = vmatprep.subr.mxu0 0.0
        %471 = vmatpush1.msra.mxu0 0.0
        %472 = vmatprep.subr.mxu0 0.0
        %473 = vmatpush1.msra.mxu0 0.0
        %474 = vmatprep.subr.mxu0 0.0
        %475 = vmatpush1.msra.mxu0 0.0
        %476 = vmatprep.subr.mxu0 0.0
        %477 = vmatpush1.msra.mxu0 0.0
        %478 = vmatprep.subr.mxu0 0.0
        %479 = vmatpush1.msra.mxu0 0.0
        %480 = vmatprep.mubr.f32.mxu0 0.0
        %481 = vmatmul.mubr.f32.gmra.mrb[0].mxu0 %v411
        %v482 = vpop.f32.mrb[0].mxu0
        %v483 = vadd.f32 %v403, %v482
        %v484 = vpop.f32.mrb[0].mxu0
        %v485 = vadd.f32 %v407, %v484
        %486 = vmatprep.mubr.f32.mxu0 0.0
        %487 = vmatmul.mubr.f32.gmra.mrb[0].mxu0 %v414
        %v488 = vpop.f32.mrb[0].mxu0
        %v489 = vadd.f32 %v403, %v488
        %v490 = vpop.f32.mrb[0].mxu0
        %v491 = vadd.f32 %v407, %v490
        %492 = vdwg.mxu0
        %v493 = vld [vmem:[%s5] sm:$0xff]
        %v494 = vld [vmem:[%s5 + $0x8] sm:$0xff]
        %v495 = vld [vmem:[%s5 + $0x10] sm:$0xff]
        %v496 = vld [vmem:[%s5 + $0x18] sm:$0xff]
        %v497 = vld [vmem:[%s5 + $0x20] sm:$0xff]
        %v498 = vld [vmem:[%s5 + $0x28] sm:$0xff]
        %v499 = vld [vmem:[%s5 + $0x30] sm:$0xff]
        %v500 = vld [vmem:[%s5 + $0x38] sm:$0xff]
        %v501 = vld [vmem:[%s5 + $0x40] sm:$0xff]
        %v502 = vld [vmem:[%s5 + $0x48] sm:$0xff]
        %v503 = vld [vmem:[%s5 + $0x50] sm:$0xff]
        %v504 = vld [vmem:[%s5 + $0x58] sm:$0xff]
        %v505 = vld [vmem:[%s5 + $0x60] sm:$0xff]
        %v506 = vld [vmem:[%s5 + $0x68] sm:$0xff]
        %v507 = vld [vmem:[%s5 + $0x70] sm:$0xff]
        %v508 = vld [vmem:[%s5 + $0x78] sm:$0xff]
        %v509 = vld [vmem:[%s6] sm:$0x3]
        %v511 = vlaneseq
        %v512 = vshrl.u32 %v511, 7
        %v513 = vsub.s32 0, %v512
        %v514 = vrot.slane %v509, %v513
        %v515 = vlaneseq
        %v516 = vshrl.u32 %v515, 7
        %v517 = vsub.s32 1, %v516
        %v518 = vrot.slane %v509, %v517
        %521 = vmatprep.subr.mxu0 %v494
        %522 = vmatpush1.msra.mxu0 %v493
        %523 = vmatprep.subr.mxu0 %v496
        %524 = vmatpush1.msra.mxu0 %v495
        %525 = vmatprep.subr.mxu0 %v498
        %526 = vmatpush1.msra.mxu0 %v497
        %527 = vmatprep.subr.mxu0 %v500
        %528 = vmatpush1.msra.mxu0 %v499
        %529 = vmatprep.subr.mxu0 %v502
        %530 = vmatpush1.msra.mxu0 %v501
        %531 = vmatprep.subr.mxu0 %v504
        %532 = vmatpush1.msra.mxu0 %v503
        %533 = vmatprep.subr.mxu0 %v506
        %534 = vmatpush1.msra.mxu0 %v505
        %535 = vmatprep.subr.mxu0 %v508
        %536 = vmatpush1.msra.mxu0 %v507
        %537 = vmatprep.subr.mxu0 0.0
        %538 = vmatpush1.msra.mxu0 0.0
        %539 = vmatprep.subr.mxu0 0.0
        %540 = vmatpush1.msra.mxu0 0.0
        %541 = vmatprep.subr.mxu0 0.0
        %542 = vmatpush1.msra.mxu0 0.0
        %543 = vmatprep.subr.mxu0 0.0
        %544 = vmatpush1.msra.mxu0 0.0
        %545 = vmatprep.subr.mxu0 0.0
        %546 = vmatpush1.msra.mxu0 0.0
        %547 = vmatprep.subr.mxu0 0.0
        %548 = vmatpush1.msra.mxu0 0.0
        %549 = vmatprep.subr.mxu0 0.0
        %550 = vmatpush1.msra.mxu0 0.0
        %551 = vmatprep.subr.mxu0 0.0
        %552 = vmatpush1.msra.mxu0 0.0
        %553 = vmatprep.subr.mxu0 0.0
        %554 = vmatpush1.msra.mxu0 0.0
        %555 = vmatprep.subr.mxu0 0.0
        %556 = vmatpush1.msra.mxu0 0.0
        %557 = vmatprep.subr.mxu0 0.0
        %558 = vmatpush1.msra.mxu0 0.0
        %559 = vmatprep.subr.mxu0 0.0
        %560 = vmatpush1.msra.mxu0 0.0
        %561 = vmatprep.subr.mxu0 0.0
        %562 = vmatpush1.msra.mxu0 0.0
        %563 = vmatprep.subr.mxu0 0.0
        %564 = vmatpush1.msra.mxu0 0.0
        %565 = vmatprep.subr.mxu0 0.0
        %566 = vmatpush1.msra.mxu0 0.0
        %567 = vmatprep.subr.mxu0 0.0
        %568 = vmatpush1.msra.mxu0 0.0
        %569 = vmatprep.subr.mxu0 0.0
        %570 = vmatpush1.msra.mxu0 0.0
        %571 = vmatprep.subr.mxu0 0.0
        %572 = vmatpush1.msra.mxu0 0.0
        %573 = vmatprep.subr.mxu0 0.0
        %574 = vmatpush1.msra.mxu0 0.0
        %575 = vmatprep.subr.mxu0 0.0
        %576 = vmatpush1.msra.mxu0 0.0
        %577 = vmatprep.subr.mxu0 0.0
        %578 = vmatpush1.msra.mxu0 0.0
        %579 = vmatprep.subr.mxu0 0.0
        %580 = vmatpush1.msra.mxu0 0.0
        %581 = vmatprep.subr.mxu0 0.0
        %582 = vmatpush1.msra.mxu0 0.0
        %583 = vmatprep.subr.mxu0 0.0
        %584 = vmatpush1.msra.mxu0 0.0
        %585 = vmatprep.mubr.f32.mxu0 0.0
        %586 = vmatmul.mubr.f32.gmra.mrb[0].mxu0 %v411
        %v587 = vpop.f32.mrb[0].mxu0
        %v588 = vadd.f32 %v514, %v587
        %v589 = vpop.f32.mrb[0].mxu0
        %v590 = vadd.f32 %v518, %v589
        %591 = vmatprep.mubr.f32.mxu0 0.0
        %592 = vmatmul.mubr.f32.gmra.mrb[0].mxu0 %v414
        %v593 = vpop.f32.mrb[0].mxu0
        %v594 = vadd.f32 %v514, %v593
        %v595 = vpop.f32.mrb[0].mxu0
        %v596 = vadd.f32 %v518, %v595
        %597 = vdwg.mxu0
        %v598 = vmul.f32 %v588, 0.5
        %v599 = vmul.f32 %v590, 0.5
        %v600 = vmul.f32 %v594, 0.5
        %v601 = vmul.f32 %v596, 0.5
        %v602 = vmul.f32 %v588, 0.70710677
        %v603 = vmul.f32 %v590, 0.70710677
        %v604 = vmul.f32 %v594, 0.70710677
        %v605 = vmul.f32 %v596, 0.70710677
        %v606 = verf.f32.pop %v602
        %v607 = verf.f32.pop %v603
        %v608 = verf.f32.pop %v604
        %v609 = verf.f32.pop %v605
        %v610 = vadd.f32 %v606, 1.0
        %v611 = vadd.f32 %v607, 1.0
        %v612 = vadd.f32 %v608, 1.0
        %v613 = vadd.f32 %v609, 1.0
        %v614 = vmul.f32 %v598, %v610
        %v615 = vmul.f32 %v599, %v611
        %v616 = vmul.f32 %v600, %v612
        %v617 = vmul.f32 %v601, %v613
        %v618 = vmul.f32 %v483, %v614
        %v619 = vmul.f32 %v485, %v615
        %v620 = vmul.f32 %v489, %v616
        %v621 = vmul.f32 %v491, %v617
        %v622 = vld [vmem:[%s7] sm:$0xff]
        %v623 = vld [vmem:[%s7 + $0x8] sm:$0xff]
        %v624 = vld [vmem:[%s7 + $0x10] sm:$0xff]
        %v625 = vld [vmem:[%s7 + $0x18] sm:$0xff]
        %v626 = vld [vmem:[%s7 + $0x20] sm:$0xff]
        %v627 = vld [vmem:[%s7 + $0x28] sm:$0xff]
        %v628 = vld [vmem:[%s7 + $0x30] sm:$0xff]
        %v629 = vld [vmem:[%s7 + $0x38] sm:$0xff]
        %v630 = vld [vmem:[%s7 + $0x40] sm:$0xff]
        %v631 = vld [vmem:[%s7 + $0x48] sm:$0xff]
        %v632 = vld [vmem:[%s7 + $0x50] sm:$0xff]
        %v633 = vld [vmem:[%s7 + $0x58] sm:$0xff]
        %v634 = vld [vmem:[%s7 + $0x60] sm:$0xff]
        %v635 = vld [vmem:[%s7 + $0x68] sm:$0xff]
        %v636 = vld [vmem:[%s7 + $0x70] sm:$0xff]
        %v637 = vld [vmem:[%s7 + $0x78] sm:$0xff]
        %v638 = vld [vmem:[%s7 + $0x80] sm:$0xff]
        %v639 = vld [vmem:[%s7 + $0x88] sm:$0xff]
        %v640 = vld [vmem:[%s7 + $0x90] sm:$0xff]
        %v641 = vld [vmem:[%s7 + $0x98] sm:$0xff]
        %v642 = vld [vmem:[%s7 + $0xa0] sm:$0xff]
        %v643 = vld [vmem:[%s7 + $0xa8] sm:$0xff]
        %v644 = vld [vmem:[%s7 + $0xb0] sm:$0xff]
        %v645 = vld [vmem:[%s7 + $0xb8] sm:$0xff]
        %v646 = vld [vmem:[%s7 + $0xc0] sm:$0xff]
        %v647 = vld [vmem:[%s7 + $0xc8] sm:$0xff]
        %v648 = vld [vmem:[%s7 + $0xd0] sm:$0xff]
        %v649 = vld [vmem:[%s7 + $0xd8] sm:$0xff]
        %v650 = vld [vmem:[%s7 + $0xe0] sm:$0xff]
        %v651 = vld [vmem:[%s7 + $0xe8] sm:$0xff]
        %v652 = vld [vmem:[%s7 + $0xf0] sm:$0xff]
        %v653 = vld [vmem:[%s7 + $0xf8] sm:$0xff]
        %v654 = vld [vmem:[%s8] sm:$0x1]
        %v656 = vlaneseq
        %v657 = vshrl.u32 %v656, 7
        %v658 = vsub.s32 0, %v657
        %v659 = vrot.slane %v654, %v658
        %661 = vmatprep.subr.mxu0 0.0
        %662 = vmatpush1.msra.mxu0 %v622
        %663 = vmatprep.subr.mxu0 0.0
        %664 = vmatpush1.msra.mxu0 %v623
        %665 = vmatprep.subr.mxu0 0.0
        %666 = vmatpush1.msra.mxu0 %v624
        %667 = vmatprep.subr.mxu0 0.0
        %668 = vmatpush1.msra.mxu0 %v625
        %669 = vmatprep.subr.mxu0 0.0
        %670 = vmatpush1.msra.mxu0 %v626
        %671 = vmatprep.subr.mxu0 0.0
        %672 = vmatpush1.msra.mxu0 %v627
        %673 = vmatprep.subr.mxu0 0.0
        %674 = vmatpush1.msra.mxu0 %v628
        %675 = vmatprep.subr.mxu0 0.0
        %676 = vmatpush1.msra.mxu0 %v629
        %677 = vmatprep.subr.mxu0 0.0
        %678 = vmatpush1.msra.mxu0 %v630
        %679 = vmatprep.subr.mxu0 0.0
        %680 = vmatpush1.msra.mxu0 %v631
        %681 = vmatprep.subr.mxu0 0.0
        %682 = vmatpush1.msra.mxu0 %v632
        %683 = vmatprep.subr.mxu0 0.0
        %684 = vmatpush1.msra.mxu0 %v633
        %685 = vmatprep.subr.mxu0 0.0
        %686 = vmatpush1.msra.mxu0 %v634
        %687 = vmatprep.subr.mxu0 0.0
        %688 = vmatpush1.msra.mxu0 %v635
        %689 = vmatprep.subr.mxu0 0.0
        %690 = vmatpush1.msra.mxu0 %v636
        %691 = vmatprep.subr.mxu0 0.0
        %692 = vmatpush1.msra.mxu0 %v637
        %693 = vmatprep.subr.mxu0 0.0
        %694 = vmatpush1.msra.mxu0 %v638
        %695 = vmatprep.subr.mxu0 0.0
        %696 = vmatpush1.msra.mxu0 %v639
        %697 = vmatprep.subr.mxu0 0.0
        %698 = vmatpush1.msra.mxu0 %v640
        %699 = vmatprep.subr.mxu0 0.0
        %700 = vmatpush1.msra.mxu0 %v641
        %701 = vmatprep.subr.mxu0 0.0
        %702 = vmatpush1.msra.mxu0 %v642
        %703 = vmatprep.subr.mxu0 0.0
        %704 = vmatpush1.msra.mxu0 %v643
        %705 = vmatprep.subr.mxu0 0.0
        %706 = vmatpush1.msra.mxu0 %v644
        %707 = vmatprep.subr.mxu0 0.0
        %708 = vmatpush1.msra.mxu0 %v645
        %709 = vmatprep.subr.mxu0 0.0
        %710 = vmatpush1.msra.mxu0 %v646
        %711 = vmatprep.subr.mxu0 0.0
        %712 = vmatpush1.msra.mxu0 %v647
        %713 = vmatprep.subr.mxu0 0.0
        %714 = vmatpush1.msra.mxu0 %v648
        %715 = vmatprep.subr.mxu0 0.0
        %716 = vmatpush1.msra.mxu0 %v649
        %717 = vmatprep.subr.mxu0 0.0
        %718 = vmatpush1.msra.mxu0 %v650
        %719 = vmatprep.subr.mxu0 0.0
        %720 = vmatpush1.msra.mxu0 %v651
        %721 = vmatprep.subr.mxu0 0.0
        %722 = vmatpush1.msra.mxu0 %v652
        %723 = vmatprep.subr.mxu0 0.0
        %724 = vmatpush1.msra.mxu0 %v653
        %725 = vmatprep.mubr.f32.mxu0 %v619
        %726 = vmatmul.mubr.f32.gmra.mrb[0].mxu0 %v618
        %v727 = vpop.f32.mrb[0].mxu0
        %v728 = vadd.f32 %v659, %v727
        %v729 = vpop.f32.mrb[0].mxu0
        %730 = vmatprep.mubr.f32.mxu0 %v621
        %731 = vmatmul.mubr.f32.gmra.mrb[0].mxu0 %v620
        %v732 = vpop.f32.mrb[0].mxu0
        %v733 = vadd.f32 %v659, %v732
        %v734 = vpop.f32.mrb[0].mxu0
        %735 = vdwg.mxu0
        %736 = vst.msk [vmem:[%s326] sm:$0xff] %vm336, %v728
        %737 = vst.msk [vmem:[%s326 + $0x8] sm:$0xff] %vm336, %v733
        %s738 = sand.u32 %s225, 1
        %s739 = scalar_lea.sflag [#allocation3], %s738
        %s740 = sand.u32 %s225, 1
        %s741 = smul.addr %s740, 16
        %s742 = scalar_lea.vmem [#allocation2], %s741
        // Predicated region
        $region57: #{tpu_custom_call.1} parent=55 // pred_check
          %p743 = pneg %p235
        $region58: #{tpu_custom_call.1} parent=55 // pred_check_branch
          %745 = sbr.rel (%p743) target = $region60
        $region59: #{tpu_custom_call.1} parent=55 // pred_region
          %s746 = smul.u32 2, %s23
          %s748 = ssub.s32 256, 256
          %749 = vsyncadd %s739, %s748
          %s750 = smul.addr %s746, 128
          %s751 = scalar_lea.hbm %s9, %s750
          %s752 = sshll.u32 %s742, 4
          %s753 = int_to_ptr.vmem [resolvable:$true] %s752
          %758 = dma.vmem_to_hbm [thread:$0]  %s753, 256, %s751, %s739, 128, 128, 8
        $region60: #{tpu_custom_call.1} parent=55 // pred_fallthru
          _
      $region56: #{tpu_custom_call.1} parent=5 // pred_fallthru
        _
      %p759 = scmp.le.s32.totalorder 2, %s18
      // Predicated region
      $region61: #{tpu_custom_call.1} parent=5 // pred_check
        %p760 = pneg %p759
      $region62: #{tpu_custom_call.1} parent=5 // pred_check_branch
        %762 = sbr.rel (%p760) target = $region64
      $region63: #{tpu_custom_call.1} parent=5 // pred_region
        %s763 = ssub.s32 %s18, 2
        // Predicated region
        $region65: #{tpu_custom_call.1} parent=63 // pred_check
          %p764 = pneg %p241
        $region66: #{tpu_custom_call.1} parent=63 // pred_check_branch
          %766 = sbr.rel (%p764) target = $region68
        $region67: #{tpu_custom_call.1} parent=63 // pred_region
          %s767 = sand.u32 %s226, 1
          %s768 = scalar_lea.sflag [#allocation3], %s767
          %s769 = sand.u32 %s226, 1
          %s770 = smul.addr %s769, 16
          %s771 = scalar_lea.vmem [#allocation2], %s770
          %772 = dma.done %s768, 256
        $region68: #{tpu_custom_call.1} parent=63 // pred_fallthru
          _
      $region64: #{tpu_custom_call.1} parent=5 // pred_fallthru
        _
    $region6: #{tpu_custom_call.1} parent=1 // loop_footer
      %s22 = sadd.s32 1, %s18
    $region7: #{tpu_custom_call.1} parent=1 // loop_footer_branch
      %17 = sbr.rel target = $region3
    $region8: #{tpu_custom_call.1} parent=1 // loop_exit
      _
    %773 = vsyncpa [#allocation3], 1
    %s774 = scalar_lea.sflag [#allocation3], 1
    %775 = vsyncpa %s774, 1

</llo_original>
